<compile_context>
chip_gen: v5e
topology: v5e:2x2
jax: 0.10.0
libtpu: 0.0.40
codegen_flags: <defaults>
</compile_context>

<pallas_src>
import functools

import jax
import jax.numpy as jnp
import numpy as np
from jax import lax
from jax.experimental import pallas as pl
from jax.experimental.pallas import tpu as pltpu


def temporal_block_kernel(x_ref, w1s_ref, b1_ref, w2s_ref, b2_ref, wd_ref, bd_ref,
                          o_ref, xcarry_ref, hcarry_ref, *, K, dilation):
    """Per (batch, sequence-tile) kernel.

    x_ref  : (1, C_in,  TL)        input tile (f32)
    w1s_ref: (C_out, K*C_in)       conv1 taps stacked along contraction (bf16)
    w2s_ref: (C_out, K*C_out)      conv2 taps stacked along contraction (bf16)
    wd_ref : (C_out, C_in)         1x1 downsample weight (bf16)
    b*_ref : (C_out, 1)            biases (f32)
    o_ref  : (1, C_out, TL)        output tile (f32)
    xcarry_ref: (C_in,  pad)       last `pad` columns of the causally-padded x stream
    hcarry_ref: (C_out, pad)       last `pad` columns of the causally-padded h stream
    """
    t = pl.program_id(1)
    TL = x_ref.shape[-1]

    @pl.when(t == 0)
    def _():
        # Causal left-padding == zero history at the start of every sequence.
        xcarry_ref[...] = jnp.zeros_like(xcarry_ref)
        hcarry_ref[...] = jnp.zeros_like(hcarry_ref)

    x_tile = x_ref[0]                                              # (C_in, TL)
    x_ext = jnp.concatenate([xcarry_ref[...], x_tile], axis=1)     # (C_in, pad+TL)

    # ---- conv1: fold the K dilated taps into a single MXU matmul (im2col) ----
    x_stack = jnp.concatenate(
        [x_ext[:, j * dilation: j * dilation + TL] for j in range(K)], axis=0)
    h = jnp.dot(w1s_ref[...], x_stack.astype(jnp.bfloat16),
                preferred_element_type=jnp.float32) + b1_ref[...]
    h = jnp.maximum(h, 0.0)            # ReLU; dropout1 = identity (inference)

    h_ext = jnp.concatenate([hcarry_ref[...], h], axis=1)          # (C_out, pad+TL)

    # ---- conv2: same stacked-contraction matmul ----
    h_stack = jnp.concatenate(
        [h_ext[:, j * dilation: j * dilation + TL] for j in range(K)], axis=0)
    out = jnp.dot(w2s_ref[...], h_stack.astype(jnp.bfloat16),
                  preferred_element_type=jnp.float32) + b2_ref[...]
    out = jnp.maximum(out, 0.0)        # ReLU; dropout2 = identity (inference)

    # ---- residual (1x1 downsample) + final ReLU ----
    res = jnp.dot(wd_ref[...], x_tile.astype(jnp.bfloat16),
                  preferred_element_type=jnp.float32) + bd_ref[...]
    o_ref[0] = jnp.maximum(out + res, 0.0)

    # Carry the last `pad` stream columns forward to the next tile of this batch.
    xcarry_ref[...] = x_ext[:, TL:]
    hcarry_ref[...] = h_ext[:, TL:]


def temporal_block(x, params, *, kernel_size, dilation):
    """x: (B, C_in, L) f32. params = (w1, b1, w2, b2, wd, bd) in PyTorch layout:
    w1: (C_out, C_in, K), w2: (C_out, C_out, K), wd: (C_out, C_in), biases: (C_out,)."""
    B, C_in, L = x.shape
    K = kernel_size
    pad = (K - 1) * dilation
    assert pad >= 1, "TCN TemporalBlock always uses kernel_size >= 2"
    w1, b1, w2, b2, wd, bd = params
    C_out = w1.shape[0]

    # MXU-friendly weight layout: (C_out, K*C) so each conv is one large-contraction matmul.
    # bf16 operands for the fast MXU path; accumulation stays f32.
    w1s = jnp.transpose(w1, (0, 2, 1)).reshape(C_out, K * C_in).astype(jnp.bfloat16)
    w2s = jnp.transpose(w2, (0, 2, 1)).reshape(C_out, K * C_out).astype(jnp.bfloat16)
    wds = wd.astype(jnp.bfloat16)
    b1c = b1.reshape(C_out, 1).astype(jnp.float32)
    b2c = b2.reshape(C_out, 1).astype(jnp.float32)
    bdc = bd.reshape(C_out, 1).astype(jnp.float32)

    # Lane-dense sequence tiling: TL is a multiple of 128 (or the full length when L is small),
    # bounding VMEM per tile instead of per sequence.
    if L < 256:
        TL = L
    elif L < 512:
        TL = 256
    else:
        TL = 512
    num_t = pl.cdiv(L, TL)
    L_pad = num_t * TL
    x_in = jnp.pad(x, ((0, 0), (0, 0), (0, L_pad - L))) if L_pad != L else x

    kern = functools.partial(temporal_block_kernel, K=K, dilation=dilation)

    y = pl.pallas_call(
        kern,
        out_shape=jax.ShapeDtypeStruct((B, C_out, L_pad), jnp.float32),
        grid=(B, num_t),
        in_specs=[
            pl.BlockSpec((1, C_in, TL), lambda b, t: (b, 0, t)),
            pl.BlockSpec((C_out, K * C_in), lambda b, t: (0, 0)),
            pl.BlockSpec((C_out, 1), lambda b, t: (0, 0)),
            pl.BlockSpec((C_out, K * C_out), lambda b, t: (0, 0)),
            pl.BlockSpec((C_out, 1), lambda b, t: (0, 0)),
            pl.BlockSpec((C_out, C_in), lambda b, t: (0, 0)),
            pl.BlockSpec((C_out, 1), lambda b, t: (0, 0)),
        ],
        out_specs=pl.BlockSpec((1, C_out, TL), lambda b, t: (b, 0, t)),
        scratch_shapes=[
            pltpu.VMEM((C_in, pad), jnp.float32),    # x causal-halo carry
            pltpu.VMEM((C_out, pad), jnp.float32),   # h causal-halo carry
        ],
        compiler_params=pltpu.CompilerParams(
            dimension_semantics=("parallel", "arbitrary"),  # batch -> megacore; seq carries state
            vmem_limit_bytes=64 * 1024 * 1024,
        ),
    )(x_in, w1s, b1c, w2s, b2c, wds, bdc)

    return y[:, :, :L] if L_pad != L else y


# -------------------- pure-JAX reference (for verification) --------------------
def ref_temporal_block(x, params, *, kernel_size, dilation):
    w1, b1, w2, b2, wd, bd = params
    pad = (kernel_size - 1) * dilation

    def causal_conv(inp, w, b):
        inp_p = jnp.pad(inp, ((0, 0), (0, 0), (pad, 0)))
        out = lax.conv_general_dilated(inp_p, w, window_strides=(1,), padding="VALID",
                                       rhs_dilation=(dilation,),
                                       dimension_numbers=("NCH", "OIH", "NCH"))
        return out + b[None, :, None]

    h = jnp.maximum(causal_conv(x, w1, b1), 0.0)
    out = jnp.maximum(causal_conv(h, w2, b2), 0.0)
    res = jnp.einsum("oc,bcl->bol", wd, x) + bd[None, :, None]
    return jnp.maximum(out + res, 0.0)


# -------------------- deterministic parameter setup --------------------
def make_params(key, n_inputs, n_outputs, kernel_size):
    k1, k2, k3, k4, k5, k6 = jax.random.split(key, 6)
    # weight_norm reparam: w = g * v/||v|| with g = ||v|| at init  =>  w == v.
    w1 = 0.01 * jax.random.normal(k1, (n_outputs, n_inputs, kernel_size), jnp.float32)
    w2 = 0.01 * jax.random.normal(k2, (n_outputs, n_outputs, kernel_size), jnp.float32)
    wd = 0.01 * jax.random.normal(k3, (n_outputs, n_inputs), jnp.float32)
    # Conv1d default bias init: uniform(-1/sqrt(fan_in), +1/sqrt(fan_in))
    bnd1 = 1.0 / np.sqrt(n_inputs * kernel_size)
    bnd2 = 1.0 / np.sqrt(n_outputs * kernel_size)
    bndd = 1.0 / np.sqrt(n_inputs)
    b1 = jax.random.uniform(k4, (n_outputs,), jnp.float32, -bnd1, bnd1)
    b2 = jax.random.uniform(k5, (n_outputs,), jnp.float32, -bnd2, bnd2)
    bd = jax.random.uniform(k6, (n_outputs,), jnp.float32, -bndd, bndd)
    return (w1, b1, w2, b2, wd, bd)


if __name__ == "__main__":
    # TemporalBlock(n_inputs=4, n_outputs=8, kernel_size=3, stride=1, dilation=2, padding=4)
    B, n_inputs, n_outputs, L = 2, 4, 8, 16
    kernel_size, dilation = 3, 2
    # TODO(synk): dropout (p=0.05) is identity here (inference semantics); no in-kernel RNG dropout.

    key = jax.random.PRNGKey(0)
    kx, kp = jax.random.split(key)
    x = jax.random.normal(kx, (B, n_inputs, L), jnp.float32)
    params = make_params(kp, n_inputs, n_outputs, kernel_size)

    y = temporal_block(x, params, kernel_size=kernel_size, dilation=dilation)
    y = jax.block_until_ready(y)

    y_ref = ref_temporal_block(x, params, kernel_size=kernel_size, dilation=dilation)
    # bf16 matmul operands => slightly looser tolerance than a pure-f32 check.
    np.testing.assert_allclose(np.asarray(y), np.asarray(y_ref), rtol=2e-2, atol=2e-3)

    print("KERNEL_OK")
</pallas_src>

<mosaic_0001>
module attributes {stable_mosaic.version = 11 : i64} {
  func.func @temporal_block_kernel(%arg0: i32, %arg1: i32, %arg2: memref<1x4x16xf32, #tpu.memory_space<vmem>>, %arg3: memref<8x12xbf16, #tpu.memory_space<vmem>>, %arg4: memref<8x1xf32, #tpu.memory_space<vmem>>, %arg5: memref<8x24xbf16, #tpu.memory_space<vmem>>, %arg6: memref<8x1xf32, #tpu.memory_space<vmem>>, %arg7: memref<8x4xbf16, #tpu.memory_space<vmem>>, %arg8: memref<8x1xf32, #tpu.memory_space<vmem>>, %arg9: memref<1x8x16xf32, #tpu.memory_space<vmem>>, %arg10: memref<4x4xf32, #tpu.memory_space<vmem>>, %arg11: memref<8x4xf32, #tpu.memory_space<vmem>>) attributes {dimension_semantics = [#tpu.dimension_semantics<parallel>, #tpu.dimension_semantics<arbitrary>], iteration_bounds = array<i64: 2, 1>, scalar_prefetch = 0 : i64, scratch_operands = 2 : i64, tpu.core_type = #tpu.core_type<tc>, window_params = [{transform_indices = @transform_0, window_bounds = array<i64: 1, 4, 16>}, {pipeline_mode = #tpu.pipeline_mode<synchronous>, transform_indices = @transform_1, window_bounds = array<i64: 8, 12>}, {pipeline_mode = #tpu.pipeline_mode<synchronous>, transform_indices = @transform_2, window_bounds = array<i64: 8, 1>}, {pipeline_mode = #tpu.pipeline_mode<synchronous>, transform_indices = @transform_3, window_bounds = array<i64: 8, 24>}, {pipeline_mode = #tpu.pipeline_mode<synchronous>, transform_indices = @transform_4, window_bounds = array<i64: 8, 1>}, {pipeline_mode = #tpu.pipeline_mode<synchronous>, transform_indices = @transform_5, window_bounds = array<i64: 8, 4>}, {pipeline_mode = #tpu.pipeline_mode<synchronous>, transform_indices = @transform_6, window_bounds = array<i64: 8, 1>}, {transform_indices = @transform_7, window_bounds = array<i64: 1, 8, 16>}]} {
    %c0_i32 = arith.constant 0 : i32
    %0 = arith.cmpi eq, %arg1, %c0_i32 : i32
    %1 = arith.extui %0 : i1 to i32
    %c0_i32_0 = arith.constant 0 : i32
    %2 = arith.cmpi ne, %1, %c0_i32_0 : i32
    scf.if %2 {
      %cst_31 = arith.constant 0.000000e+00 : f32
      %49 = vector.broadcast %cst_31 : f32 to vector<4x4xf32>
      %c0_32 = arith.constant 0 : index
      %c0_33 = arith.constant 0 : index
      %50 = vector.load %arg10[%c0_32, %c0_33] : memref<4x4xf32, #tpu.memory_space<vmem>>, vector<4x4xf32>
      tpu.vector_store %arg10[%c0_32, %c0_33], %49 {strides = array<i32>} : memref<4x4xf32, #tpu.memory_space<vmem>>, vector<4x4xf32>,
      %cst_34 = arith.constant 0.000000e+00 : f32
      %51 = vector.broadcast %cst_34 : f32 to vector<8x4xf32>
      %c0_35 = arith.constant 0 : index
      %c0_36 = arith.constant 0 : index
      %52 = vector.load %arg11[%c0_35, %c0_36] : memref<8x4xf32, #tpu.memory_space<vmem>>, vector<8x4xf32>
      tpu.vector_store %arg11[%c0_35, %c0_36], %51 {strides = array<i32>} : memref<8x4xf32, #tpu.memory_space<vmem>>, vector<8x4xf32>,
    } else {
    }
    %c0 = arith.constant 0 : index
    %c0_1 = arith.constant 0 : index
    %c0_2 = arith.constant 0 : index
    %3 = vector.load %arg2[%c0, %c0_1, %c0_2] : memref<1x4x16xf32, #tpu.memory_space<vmem>>, vector<1x4x16xf32>
    %4 = vector.shape_cast %3 : vector<1x4x16xf32> to vector<4x16xf32>
    %c0_3 = arith.constant 0 : index
    %c0_4 = arith.constant 0 : index
    %5 = vector.load %arg10[%c0_3, %c0_4] : memref<4x4xf32, #tpu.memory_space<vmem>>, vector<4x4xf32>
    %6 = tpu.concatenate %5, %4 in 1 : vector<4x4xf32>, vector<4x16xf32> -> vector<4x20xf32>
    %7 = vector.extract_strided_slice %6 {offsets = [0, 0], sizes = [4, 16], strides = [1, 1]} : vector<4x20xf32> to vector<4x16xf32>
    %8 = vector.extract_strided_slice %6 {offsets = [0, 2], sizes = [4, 16], strides = [1, 1]} : vector<4x20xf32> to vector<4x16xf32>
    %9 = vector.extract_strided_slice %6 {offsets = [0, 4], sizes = [4, 16], strides = [1, 1]} : vector<4x20xf32> to vector<4x16xf32>
    %10 = tpu.concatenate %7, %8, %9 in 0 : vector<4x16xf32>, vector<4x16xf32>, vector<4x16xf32> -> vector<12x16xf32>
    %c0_5 = arith.constant 0 : index
    %c0_6 = arith.constant 0 : index
    %11 = vector.load %arg3[%c0_5, %c0_6] : memref<8x12xbf16, #tpu.memory_space<vmem>>, vector<8x12xbf16>
    %12 = arith.truncf %10 : vector<12x16xf32> to vector<12x16xbf16>
    %cst = arith.constant dense<0.000000e+00> : vector<8x16xf32>
    %13 = tpu.matmul %11, %12, %cst {dimension_numbers = #tpu.dot_dimension_numbers<[1], [0], [0], [1], [0, 0, 1, 1], [], []>} : vector<8x12xbf16>, vector<12x16xbf16>, vector<8x16xf32> -> vector<8x16xf32>
    %c0_7 = arith.constant 0 : index
    %c0_8 = arith.constant 0 : index
    %14 = vector.load %arg4[%c0_7, %c0_8] : memref<8x1xf32, #tpu.memory_space<vmem>>, vector<8x1xf32>
    %15 = vector.broadcast %14 : vector<8x1xf32> to vector<8x16xf32>
    %16 = arith.addf %13, %15 : vector<8x16xf32>
    %cst_9 = arith.constant 0.000000e+00 : f32
    %17 = vector.broadcast %cst_9 : f32 to vector<8x16xf32>
    %18 = arith.maximumf %16, %17 : vector<8x16xf32>
    %c0_10 = arith.constant 0 : index
    %c0_11 = arith.constant 0 : index
    %19 = vector.load %arg11[%c0_10, %c0_11] : memref<8x4xf32, #tpu.memory_space<vmem>>, vector<8x4xf32>
    %20 = tpu.concatenate %19, %18 in 1 : vector<8x4xf32>, vector<8x16xf32> -> vector<8x20xf32>
    %21 = vector.extract_strided_slice %20 {offsets = [0, 0], sizes = [8, 16], strides = [1, 1]} : vector<8x20xf32> to vector<8x16xf32>
    %22 = vector.extract_strided_slice %20 {offsets = [0, 2], sizes = [8, 16], strides = [1, 1]} : vector<8x20xf32> to vector<8x16xf32>
    %23 = vector.extract_strided_slice %20 {offsets = [0, 4], sizes = [8, 16], strides = [1, 1]} : vector<8x20xf32> to vector<8x16xf32>
    %24 = tpu.concatenate %21, %22, %23 in 0 : vector<8x16xf32>, vector<8x16xf32>, vector<8x16xf32> -> vector<24x16xf32>
    %c0_12 = arith.constant 0 : index
    %c0_13 = arith.constant 0 : index
    %25 = vector.load %arg5[%c0_12, %c0_13] : memref<8x24xbf16, #tpu.memory_space<vmem>>, vector<8x24xbf16>
    %26 = arith.truncf %24 : vector<24x16xf32> to vector<24x16xbf16>
    %cst_14 = arith.constant dense<0.000000e+00> : vector<8x16xf32>
    %27 = tpu.matmul %25, %26, %cst_14 {dimension_numbers = #tpu.dot_dimension_numbers<[1], [0], [0], [1], [0, 0, 1, 1], [], []>} : vector<8x24xbf16>, vector<24x16xbf16>, vector<8x16xf32> -> vector<8x16xf32>
    %c0_15 = arith.constant 0 : index
    %c0_16 = arith.constant 0 : index
    %28 = vector.load %arg6[%c0_15, %c0_16] : memref<8x1xf32, #tpu.memory_space<vmem>>, vector<8x1xf32>
    %29 = vector.broadcast %28 : vector<8x1xf32> to vector<8x16xf32>
    %30 = arith.addf %27, %29 : vector<8x16xf32>
    %cst_17 = arith.constant 0.000000e+00 : f32
    %31 = vector.broadcast %cst_17 : f32 to vector<8x16xf32>
    %32 = arith.maximumf %30, %31 : vector<8x16xf32>
    %c0_18 = arith.constant 0 : index
    %c0_19 = arith.constant 0 : index
    %33 = vector.load %arg7[%c0_18, %c0_19] : memref<8x4xbf16, #tpu.memory_space<vmem>>, vector<8x4xbf16>
    %34 = arith.truncf %4 : vector<4x16xf32> to vector<4x16xbf16>
    %cst_20 = arith.constant dense<0.000000e+00> : vector<8x16xf32>
    %35 = tpu.matmul %33, %34, %cst_20 {dimension_numbers = #tpu.dot_dimension_numbers<[1], [0], [0], [1], [0, 0, 1, 1], [], []>} : vector<8x4xbf16>, vector<4x16xbf16>, vector<8x16xf32> -> vector<8x16xf32>
    %c0_21 = arith.constant 0 : index
    %c0_22 = arith.constant 0 : index
    %36 = vector.load %arg8[%c0_21, %c0_22] : memref<8x1xf32, #tpu.memory_space<vmem>>, vector<8x1xf32>
    %37 = vector.broadcast %36 : vector<8x1xf32> to vector<8x16xf32>
    %38 = arith.addf %35, %37 : vector<8x16xf32>
    %39 = arith.addf %32, %38 : vector<8x16xf32>
    %cst_23 = arith.constant 0.000000e+00 : f32
    %40 = vector.broadcast %cst_23 : f32 to vector<8x16xf32>
    %41 = arith.maximumf %39, %40 : vector<8x16xf32>
    %c0_24 = arith.constant 0 : index
    %c0_25 = arith.constant 0 : index
    %c0_26 = arith.constant 0 : index
    %42 = vector.load %arg9[%c0_24, %c0_25, %c0_26] : memref<1x8x16xf32, #tpu.memory_space<vmem>>, vector<1x8x16xf32>
    %43 = vector.shape_cast %42 : vector<1x8x16xf32> to vector<8x16xf32>
    %44 = vector.shape_cast %41 : vector<8x16xf32> to vector<1x8x16xf32>
    tpu.vector_store %arg9[%c0_24, %c0_25, %c0_26], %44 {strides = array<i32>} : memref<1x8x16xf32, #tpu.memory_space<vmem>>, vector<1x8x16xf32>,
    %45 = vector.extract_strided_slice %6 {offsets = [0, 16], sizes = [4, 4], strides = [1, 1]} : vector<4x20xf32> to vector<4x4xf32>
    %c0_27 = arith.constant 0 : index
    %c0_28 = arith.constant 0 : index
    %46 = vector.load %arg10[%c0_27, %c0_28] : memref<4x4xf32, #tpu.memory_space<vmem>>, vector<4x4xf32>
    tpu.vector_store %arg10[%c0_27, %c0_28], %45 {strides = array<i32>} : memref<4x4xf32, #tpu.memory_space<vmem>>, vector<4x4xf32>,
    %47 = vector.extract_strided_slice %20 {offsets = [0, 16], sizes = [8, 4], strides = [1, 1]} : vector<8x20xf32> to vector<8x4xf32>
    %c0_29 = arith.constant 0 : index
    %c0_30 = arith.constant 0 : index
    %48 = vector.load %arg11[%c0_29, %c0_30] : memref<8x4xf32, #tpu.memory_space<vmem>>, vector<8x4xf32>
    tpu.vector_store %arg11[%c0_29, %c0_30], %47 {strides = array<i32>} : memref<8x4xf32, #tpu.memory_space<vmem>>, vector<8x4xf32>,
    return
  }
  func.func @transform_0(%arg0: i32, %arg1: i32) -> (i32, i32, i32) {
    %c0_i32 = arith.constant 0 : i32
    %c0_i32_0 = arith.constant 0 : i32
    return %arg0, %c0_i32, %arg1 : i32, i32, i32
  }
  func.func @transform_1(%arg0: i32, %arg1: i32) -> (i32, i32) {
    %c0_i32 = arith.constant 0 : i32
    %c0_i32_0 = arith.constant 0 : i32
    %c0_i32_1 = arith.constant 0 : i32
    return %c0_i32, %c0_i32_0 : i32, i32
  }
  func.func @transform_2(%arg0: i32, %arg1: i32) -> (i32, i32) {
    %c0_i32 = arith.constant 0 : i32
    %c0_i32_0 = arith.constant 0 : i32
    %c0_i32_1 = arith.constant 0 : i32
    return %c0_i32, %c0_i32_0 : i32, i32
  }
  func.func @transform_3(%arg0: i32, %arg1: i32) -> (i32, i32) {
    %c0_i32 = arith.constant 0 : i32
    %c0_i32_0 = arith.constant 0 : i32
    %c0_i32_1 = arith.constant 0 : i32
    return %c0_i32, %c0_i32_0 : i32, i32
  }
  func.func @transform_4(%arg0: i32, %arg1: i32) -> (i32, i32) {
    %c0_i32 = arith.constant 0 : i32
    %c0_i32_0 = arith.constant 0 : i32
    %c0_i32_1 = arith.constant 0 : i32
    return %c0_i32, %c0_i32_0 : i32, i32
  }
  func.func @transform_5(%arg0: i32, %arg1: i32) -> (i32, i32) {
    %c0_i32 = arith.constant 0 : i32
    %c0_i32_0 = arith.constant 0 : i32
    %c0_i32_1 = arith.constant 0 : i32
    return %c0_i32, %c0_i32_0 : i32, i32
  }
  func.func @transform_6(%arg0: i32, %arg1: i32) -> (i32, i32) {
    %c0_i32 = arith.constant 0 : i32
    %c0_i32_0 = arith.constant 0 : i32
    %c0_i32_1 = arith.constant 0 : i32
    return %c0_i32, %c0_i32_0 : i32, i32
  }
  func.func @transform_7(%arg0: i32, %arg1: i32) -> (i32, i32, i32) {
    %c0_i32 = arith.constant 0 : i32
    %c0_i32_0 = arith.constant 0 : i32
    return %arg0, %c0_i32, %arg1 : i32, i32, i32
  }
}

</mosaic_0001>

<llo_original>
// kernel: tpu_custom_call.1
$region0: #{tpu_custom_call.1}
  #allocation0 [shape = 'u32[]', space=smem, size = 0x4, offset = 0x4, fixed_abs, tag = 'smem constant byte address 0x4 - core index']
  #allocation1 [shape = 'u32[72,128]{1,0:T(1,128)}', space=vmem, size = 0x9000, scoped, tag = 'internal scratch']
  #allocation2 [shape = 'f32[4,4]{1,0:T(4,128)}', space=vmem, size = 0x800, scoped, tag = 'scratch operand']
  #allocation3 [shape = 'f32[8,4]{1,0:T(8,128)}', space=vmem, size = 0x1000, scoped, tag = 'scratch operand']
  %s0 = inlined_call_operand.vmem [shape: f32[2,4,16], index: 0, kind: input, shape index: {}]
  %s1 = inlined_call_operand.vmem [shape: bf16[8,12], index: 1, kind: input, shape index: {}]
  %s2 = inlined_call_operand.vmem [shape: f32[8,1], index: 2, kind: input, shape index: {}]
  %s3 = inlined_call_operand.vmem [shape: bf16[8,24], index: 3, kind: input, shape index: {}]
  %s4 = inlined_call_operand.vmem [shape: f32[8,1], index: 4, kind: input, shape index: {}]
  %s5 = inlined_call_operand.vmem [shape: bf16[8,4], index: 5, kind: input, shape index: {}]
  %s6 = inlined_call_operand.vmem [shape: f32[8,1], index: 6, kind: input, shape index: {}]
  %s7 = inlined_call_operand.hbm [shape: f32[2,8,16], index: 7, kind: output, shape index: {}]
  %s8 = sld [smem:[#allocation0]]
  $region65: #{tpu_custom_call.1} parent=0
    _
  %s10 = ssub.s32 1, %s8
  %s11 = scalar_select 0, %s10, %s8
  $region1: #{tpu_custom_call.1} parent=0
    #allocation4 [shape = 'u8[8192]{0}', space=vmem, size = 0x2000, scoped, tag = 'output window, operand 0']
    #allocation5 [shape = 's32[2]{0}', space=sflag, size = 0x8, scoped, tag = 'scoped memory for tpu_custom_call.1']
    %12 = vsyncpa [#allocation5], 0
    %s13 = scalar_lea.sflag [#allocation5], 1
    %14 = vsyncpa %s13, 0
    loop: start=0, step=1, limit=4
    $region2: #{tpu_custom_call.1} parent=1 // loop_pre_header
      _
    $region3: #{tpu_custom_call.1} parent=1 // loop_header
      %s16 = sphi 0, %s20
      %p17 = scmp.ge.s32.totalorder %s16, 4
      %s23 = sphi 0, %s35
      %s24 = sphi 0, %s31
      %s25 = sphi 0, %s23
      %s26 = sphi 0, %s24
      %s27 = sphi 0, %s25
      %s28 = sphi 0, %s26
      %s40 = sphi 0, %s42
      %s43 = sphi 0, %s40
      %s44 = sphi 0, %s43
      %s60 = sphi 0, %s44
      %s64 = sphi 0, %s64
      %s66 = sphi 0, %s64
      %s67 = sphi 0, %s66
      %s81 = sphi 0, %s67
      %s85 = sphi 0, %s85
      %s87 = sphi 0, %s85
      %s88 = sphi 0, %s87
      %s102 = sphi 0, %s88
      %s106 = sphi 0, %s106
      %s108 = sphi 0, %s106
      %s109 = sphi 0, %s108
      %s123 = sphi 0, %s109
      %s127 = sphi 0, %s127
      %s129 = sphi 0, %s127
      %s130 = sphi 0, %s129
      %s144 = sphi 0, %s130
      %s148 = sphi 0, %s148
      %s150 = sphi 0, %s148
      %s151 = sphi 0, %s150
      %s165 = sphi 0, %s151
      %s169 = sphi 0, %s169
      %s171 = sphi 0, %s169
      %s172 = sphi 0, %s171
      %s186 = sphi 0, %s172
      %s194 = sphi 0, %s196
      %s197 = sphi 0, %s194
      %s198 = sphi 0, %s197
      %s214 = sphi 0, %s198
    $region4: #{tpu_custom_call.1} parent=1 // loop_header_branch
      %19 = sbr.rel (%p17) target = $region8
    $region5: #{tpu_custom_call.1} parent=1 // loop_body
      %s21 = ssub.s32 %s16, 1
      %s22 = ssub.s32 %s16, 2
      %s29 = sadd.s32 1, %s24
      %p30 = scmp.ge.s32.totalorder %s29, 1
      %s31 = scalar_select %p30, 0, %s29
      %s32 = sadd.s32 1, %s23
      %s33 = scalar_select %p30, %s32, %s23
      %p34 = scmp.ge.s32.totalorder %s33, 2
      %s35 = scalar_select %p34, 0, %s33
      %s36 = ssub.s32 %s23, %s35
      %s37 = ssub.s32 %s24, %s31
      %s38 = sor.u32 %s36, %s37
      %p39 = scmp.eq.s32.totalorder %s38, 0
      %s41 = sadd.s32 %s40, 1
      %s42 = scalar_select %p39, %s40, %s41
      %p45 = pneg %p39
      %p46 = scmp.eq.s32.totalorder %s16, 1
      %p47 = por %p45, %p46
      %p48 = scmp.ne.s32.totalorder %s40, %s43
      %p49 = scmp.eq.s32.totalorder %s16, 0
      %p50 = por %p48, %p49
      %p51 = scmp.ne.s32.totalorder %s40, %s43
      %p52 = scmp.eq.s32.totalorder %s21, 1
      %p53 = por %p51, %p52
      %p54 = scmp.ne.s32.totalorder %s43, %s44
      %p55 = scmp.eq.s32.totalorder %s21, 0
      %p56 = por %p54, %p55
      %p57 = scmp.ne.s32.totalorder %s43, %s44
      %p58 = scmp.eq.s32.totalorder %s22, 1
      %p59 = por %p57, %p58
      %p61 = scmp.ne.s32.totalorder %s44, %s60
      %p62 = scmp.eq.s32.totalorder %s22, 0
      %p63 = por %p61, %p62
      %s65 = sadd.s32 %s64, 1
      %p68 = scmp.eq.s32.totalorder %s16, 1
      %p69 = scmp.ne.s32.totalorder %s64, %s66
      %p70 = scmp.eq.s32.totalorder %s16, 0
      %p71 = por %p69, %p70
      %p72 = scmp.ne.s32.totalorder %s64, %s66
      %p73 = scmp.eq.s32.totalorder %s21, 1
      %p74 = por %p72, %p73
      %p75 = scmp.ne.s32.totalorder %s66, %s67
      %p76 = scmp.eq.s32.totalorder %s21, 0
      %p77 = por %p75, %p76
      %p78 = scmp.ne.s32.totalorder %s66, %s67
      %p79 = scmp.eq.s32.totalorder %s22, 1
      %p80 = por %p78, %p79
      %p82 = scmp.ne.s32.totalorder %s67, %s81
      %p83 = scmp.eq.s32.totalorder %s22, 0
      %p84 = por %p82, %p83
      %s86 = sadd.s32 %s85, 1
      %p89 = scmp.eq.s32.totalorder %s16, 1
      %p90 = scmp.ne.s32.totalorder %s85, %s87
      %p91 = scmp.eq.s32.totalorder %s16, 0
      %p92 = por %p90, %p91
      %p93 = scmp.ne.s32.totalorder %s85, %s87
      %p94 = scmp.eq.s32.totalorder %s21, 1
      %p95 = por %p93, %p94
      %p96 = scmp.ne.s32.totalorder %s87, %s88
      %p97 = scmp.eq.s32.totalorder %s21, 0
      %p98 = por %p96, %p97
      %p99 = scmp.ne.s32.totalorder %s87, %s88
      %p100 = scmp.eq.s32.totalorder %s22, 1
      %p101 = por %p99, %p100
      %p103 = scmp.ne.s32.totalorder %s88, %s102
      %p104 = scmp.eq.s32.totalorder %s22, 0
      %p105 = por %p103, %p104
      %s107 = sadd.s32 %s106, 1
      %p110 = scmp.eq.s32.totalorder %s16, 1
      %p111 = scmp.ne.s32.totalorder %s106, %s108
      %p112 = scmp.eq.s32.totalorder %s16, 0
      %p113 = por %p111, %p112
      %p114 = scmp.ne.s32.totalorder %s106, %s108
      %p115 = scmp.eq.s32.totalorder %s21, 1
      %p116 = por %p114, %p115
      %p117 = scmp.ne.s32.totalorder %s108, %s109
      %p118 = scmp.eq.s32.totalorder %s21, 0
      %p119 = por %p117, %p118
      %p120 = scmp.ne.s32.totalorder %s108, %s109
      %p121 = scmp.eq.s32.totalorder %s22, 1
      %p122 = por %p120, %p121
      %p124 = scmp.ne.s32.totalorder %s109, %s123
      %p125 = scmp.eq.s32.totalorder %s22, 0
      %p126 = por %p124, %p125
      %s128 = sadd.s32 %s127, 1
      %p131 = scmp.eq.s32.totalorder %s16, 1
      %p132 = scmp.ne.s32.totalorder %s127, %s129
      %p133 = scmp.eq.s32.totalorder %s16, 0
      %p134 = por %p132, %p133
      %p135 = scmp.ne.s32.totalorder %s127, %s129
      %p136 = scmp.eq.s32.totalorder %s21, 1
      %p137 = por %p135, %p136
      %p138 = scmp.ne.s32.totalorder %s129, %s130
      %p139 = scmp.eq.s32.totalorder %s21, 0
      %p140 = por %p138, %p139
      %p141 = scmp.ne.s32.totalorder %s129, %s130
      %p142 = scmp.eq.s32.totalorder %s22, 1
      %p143 = por %p141, %p142
      %p145 = scmp.ne.s32.totalorder %s130, %s144
      %p146 = scmp.eq.s32.totalorder %s22, 0
      %p147 = por %p145, %p146
      %s149 = sadd.s32 %s148, 1
      %p152 = scmp.eq.s32.totalorder %s16, 1
      %p153 = scmp.ne.s32.totalorder %s148, %s150
      %p154 = scmp.eq.s32.totalorder %s16, 0
      %p155 = por %p153, %p154
      %p156 = scmp.ne.s32.totalorder %s148, %s150
      %p157 = scmp.eq.s32.totalorder %s21, 1
      %p158 = por %p156, %p157
      %p159 = scmp.ne.s32.totalorder %s150, %s151
      %p160 = scmp.eq.s32.totalorder %s21, 0
      %p161 = por %p159, %p160
      %p162 = scmp.ne.s32.totalorder %s150, %s151
      %p163 = scmp.eq.s32.totalorder %s22, 1
      %p164 = por %p162, %p163
      %p166 = scmp.ne.s32.totalorder %s151, %s165
      %p167 = scmp.eq.s32.totalorder %s22, 0
      %p168 = por %p166, %p167
      %s170 = sadd.s32 %s169, 1
      %p173 = scmp.eq.s32.totalorder %s16, 1
      %p174 = scmp.ne.s32.totalorder %s169, %s171
      %p175 = scmp.eq.s32.totalorder %s16, 0
      %p176 = por %p174, %p175
      %p177 = scmp.ne.s32.totalorder %s169, %s171
      %p178 = scmp.eq.s32.totalorder %s21, 1
      %p179 = por %p177, %p178
      %p180 = scmp.ne.s32.totalorder %s171, %s172
      %p181 = scmp.eq.s32.totalorder %s21, 0
      %p182 = por %p180, %p181
      %p183 = scmp.ne.s32.totalorder %s171, %s172
      %p184 = scmp.eq.s32.totalorder %s22, 1
      %p185 = por %p183, %p184
      %p187 = scmp.ne.s32.totalorder %s172, %s186
      %p188 = scmp.eq.s32.totalorder %s22, 0
      %p189 = por %p187, %p188
      %s190 = ssub.s32 %s23, %s35
      %s191 = ssub.s32 %s24, %s31
      %s192 = sor.u32 %s190, %s191
      %p193 = scmp.eq.s32.totalorder %s192, 0
      %s195 = sadd.s32 %s194, 1
      %s196 = scalar_select %p193, %s194, %s195
      %p199 = pneg %p193
      %p200 = scmp.eq.s32.totalorder %s16, 1
      %p201 = por %p199, %p200
      %p202 = scmp.ne.s32.totalorder %s194, %s197
      %p203 = scmp.eq.s32.totalorder %s16, 0
      %p204 = por %p202, %p203
      %p205 = scmp.ne.s32.totalorder %s194, %s197
      %p206 = scmp.eq.s32.totalorder %s21, 1
      %p207 = por %p205, %p206
      %p208 = scmp.ne.s32.totalorder %s197, %s198
      %p209 = scmp.eq.s32.totalorder %s21, 0
      %p210 = por %p208, %p209
      %p211 = scmp.ne.s32.totalorder %s197, %s198
      %p212 = scmp.eq.s32.totalorder %s22, 1
      %p213 = por %p211, %p212
      %p215 = scmp.ne.s32.totalorder %s198, %s214
      %p216 = scmp.eq.s32.totalorder %s22, 0
      %p217 = por %p215, %p216
      %p218 = scmp.le.s32.totalorder 1, %s16
      %p219 = scmp.lt.s32.totalorder %s16, 3
      %p220 = pnand %p218, %p219
      %p221 = pneg %p220
      // Predicated region
      $region9: #{tpu_custom_call.1} parent=5 // pred_check
        _
      $region10: #{tpu_custom_call.1} parent=5 // pred_check_branch
        %223 = sbr.rel (%p220) target = $region12
      $region11: #{tpu_custom_call.1} parent=5 // pred_region
        %s224 = ssub.s32 %s16, 1
        // Predicated region
        $region13: #{tpu_custom_call.1} parent=11 // pred_check
          %p225 = pneg %p77
        $region14: #{tpu_custom_call.1} parent=11 // pred_check_branch
          %227 = sbr.rel (%p225) target = $region16
        $region15: #{tpu_custom_call.1} parent=11 // pred_region
          _
        $region16: #{tpu_custom_call.1} parent=11 // pred_fallthru
          _
        // Predicated region
        $region17: #{tpu_custom_call.1} parent=11 // pred_check
          %p228 = pneg %p98
        $region18: #{tpu_custom_call.1} parent=11 // pred_check_branch
          %230 = sbr.rel (%p228) target = $region20
        $region19: #{tpu_custom_call.1} parent=11 // pred_region
          _
        $region20: #{tpu_custom_call.1} parent=11 // pred_fallthru
          _
        // Predicated region
        $region21: #{tpu_custom_call.1} parent=11 // pred_check
          %p231 = pneg %p119
        $region22: #{tpu_custom_call.1} parent=11 // pred_check_branch
          %233 = sbr.rel (%p231) target = $region24
        $region23: #{tpu_custom_call.1} parent=11 // pred_region
          _
        $region24: #{tpu_custom_call.1} parent=11 // pred_fallthru
          _
        // Predicated region
        $region25: #{tpu_custom_call.1} parent=11 // pred_check
          %p234 = pneg %p140
        $region26: #{tpu_custom_call.1} parent=11 // pred_check_branch
          %236 = sbr.rel (%p234) target = $region28
        $region27: #{tpu_custom_call.1} parent=11 // pred_region
          _
        $region28: #{tpu_custom_call.1} parent=11 // pred_fallthru
          _
        // Predicated region
        $region29: #{tpu_custom_call.1} parent=11 // pred_check
          %p237 = pneg %p161
        $region30: #{tpu_custom_call.1} parent=11 // pred_check_branch
          %239 = sbr.rel (%p237) target = $region32
        $region31: #{tpu_custom_call.1} parent=11 // pred_region
          _
        $region32: #{tpu_custom_call.1} parent=11 // pred_fallthru
          _
        // Predicated region
        $region33: #{tpu_custom_call.1} parent=11 // pred_check
          %p240 = pneg %p182
        $region34: #{tpu_custom_call.1} parent=11 // pred_check_branch
          %242 = sbr.rel (%p240) target = $region36
        $region35: #{tpu_custom_call.1} parent=11 // pred_region
          _
        $region36: #{tpu_custom_call.1} parent=11 // pred_fallthru
          _
      $region12: #{tpu_custom_call.1} parent=5 // pred_fallthru
        _
      %p243 = scmp.lt.s32.totalorder %s16, 2
      // Predicated region
      $region37: #{tpu_custom_call.1} parent=5 // pred_check
        %p244 = pneg %p243
      $region38: #{tpu_custom_call.1} parent=5 // pred_check_branch
        %246 = sbr.rel (%p244) target = $region40
      $region39: #{tpu_custom_call.1} parent=5 // pred_region
        // Predicated region
        $region41: #{tpu_custom_call.1} parent=39 // pred_check
          %p247 = pneg %p50
        $region42: #{tpu_custom_call.1} parent=39 // pred_check_branch
          %249 = sbr.rel (%p247) target = $region44
        $region43: #{tpu_custom_call.1} parent=39 // pred_region
          %p250 = scmp.lt.s32.totalorder %s23, 1
          %s251 = scalar_select %p250, %s23, 1
          %p252 = scmp.lt.s32.totalorder %s24, 0
          %s253 = scalar_select %p252, %s24, 0
          %s254 = sadd.s32 %s253, %s251
          %s255 = smul.addr %s254, 4
          %s256 = scalar_lea.vmem %s0, %s255
        $region44: #{tpu_custom_call.1} parent=39 // pred_fallthru
          _
      $region40: #{tpu_custom_call.1} parent=5 // pred_fallthru
        _
      %p257 = scmp.le.s32.totalorder 1, %s16
      %p258 = scmp.lt.s32.totalorder %s16, 3
      %p259 = pnand %p257, %p258
      %p260 = pneg %p259
      // Predicated region
      $region45: #{tpu_custom_call.1} parent=5 // pred_check
        _
      $region46: #{tpu_custom_call.1} parent=5 // pred_check_branch
        %262 = sbr.rel (%p259) target = $region48
      $region47: #{tpu_custom_call.1} parent=5 // pred_region
        %s263 = ssub.s32 %s16, 1
        %p264 = scmp.lt.s32.totalorder %s25, 1
        %s265 = scalar_select %p264, %s25, 1
        %p266 = scmp.lt.s32.totalorder %s26, 0
        %s267 = scalar_select %p266, %s26, 0
        %s268 = sadd.s32 %s267, %s265
        %s269 = smul.addr %s268, 4
        %s270 = scalar_lea.vmem %s0, %s269
        %p271 = pneg %p56
        %p272 = pneg %p53
        %p273 = pneg %p77
        %p274 = pneg %p74
        %p275 = pneg %p98
        %p276 = pneg %p95
        %p277 = pneg %p119
        %p278 = pneg %p116
        %p279 = pneg %p140
        %p280 = pneg %p137
        %p281 = pneg %p161
        %p282 = pneg %p158
        %p283 = pneg %p182
        %p284 = pneg %p179
        %p285 = pneg %p210
        %p286 = pneg %p207
        %s287 = sand.u32 %s197, 1
        %s288 = scalar_lea.sflag [#allocation5], %s287
        %s289 = sand.u32 %s197, 1
        %s290 = smul.addr %s289, 8
        %s291 = scalar_lea.vmem [#allocation4], %s290
        %p292 = scmp.lt.s32.totalorder %s25, 1
        %s293 = scalar_select %p292, %s25, 1
        %p294 = scmp.lt.s32.totalorder %s26, 0
        %s295 = scalar_select %p294, %s26, 0
        %s296 = sadd.s32 %s295, %s293
        %s297 = smul.addr %s296, 4
        %s298 = scalar_lea.vmem %s0, %s297
        %p300 = scmp.eq.s32.totalorder %s26, 0
        // Predicated region
        $region49: #{tpu_custom_call.1} parent=47 // pred_check
          %p301 = pneg %p300
        $region50: #{tpu_custom_call.1} parent=47 // pred_check_branch
          %303 = sbr.rel (%p301) target = $region52
        $region51: #{tpu_custom_call.1} parent=47 // pred_region
          %vm304 = vcmask 27648
          %305 = vst.msk [vmem:[#allocation2] sm:$0xf] %vm304, 0.0
          %vm306 = vcmask 31744
          %307 = vst.msk [vmem:[#allocation3] sm:$0xff] %vm306, 0.0
        $region52: #{tpu_custom_call.1} parent=47 // pred_fallthru
          _
        %v308 = vld [vmem:[%s298] sm:$0xf]
        %v309 = vld [vmem:[#allocation2] sm:$0xf]
        %311 = vrot.lane.b32.xlu0 %v308, 4
        %v312 = vpop.permute.xlu0 %311
        %vm314 = vcmask 31744
        %v315 = vsel %vm314, %v309, %v312
        %v317 = vrot.slane %v315, 4
        %318 = vrot.lane.b32.xlu0 %v317, 126
        %v319 = vpop.permute.xlu0 %318
        %321 = vrot.lane.b32.xlu0 %v315, 124
        %v322 = vpop.permute.xlu0 %321
        %vm324 = vcmask 1043456
        %v325 = vsel %vm324, %v315, %v319
        %v326 = vld [vmem:[%s1] sm:$0xf]
        %v327 = vpack.c.bf16 %v322, %v325
        %v328 = vld [vmem:[%s2] sm:$0xff]
        %330 = vset.pattern.permute.xlu0 0
        %331 = vperm.xlu0 %330, %v328
        %v332 = vpop.permute.xlu0 %331
        %vm334 = vcmask 97280
        %v336 = vsel %vm334, %v326, 0
        %vm338 = vcmask 1045504
        %v340 = vsel %vm338, %v327, 0
        %342 = vmatpush.bf16.msra.mxu0 0
        %343 = vmatpush.bf16.msra.mxu0 0
        %344 = vmatpush.bf16.msra.mxu0 0
        %345 = vmatpush.bf16.msra.mxu0 0
        %346 = vmatpush.bf16.msra.mxu0 0
        %347 = vmatpush.bf16.msra.mxu0 0
        %348 = vmatpush.bf16.msra.mxu0 0
        %349 = vmatpush.bf16.msra.mxu0 %v340
        %350 = vmatmul.bf16.gmra.mxu0 %v336
        %v351 = vpop.f32.mrf.mxu0
        %v352 = vadd.f32 %v332, %v351
        %v353 = vpop.f32.mrf.mxu0
        %354 = vdwg.mxu0
        %v355 = vmax.f32 %v352, 0.0
        %v356 = vld [vmem:[#allocation3] sm:$0xff]
        %358 = vrot.lane.b32.xlu0 %v355, 4
        %v359 = vpop.permute.xlu0 %358
        %v361 = vsel %vm314, %v356, %v359
        %363 = vrot.lane.b32.xlu0 %v361, 126
        %v364 = vpop.permute.xlu0 %363
        %366 = vrot.lane.b32.xlu0 %v361, 124
        %v367 = vpop.permute.xlu0 %366
        %v369 = vld [vmem:[%s3] sm:$0xf]
        %v370 = vpack.c.bf16 %v364, %v361
        %v371 = vpack.c.bf16 %v367, %v367
        %v372 = vld [vmem:[%s4] sm:$0xff]
        %374 = vset.pattern.permute.xlu0 0
        %375 = vperm.xlu0 %374, %v372
        %v376 = vpop.permute.xlu0 %375
        %vm378 = vcmask 195584
        %v380 = vsel %vm378, %v369, 0
        %v383 = vsel %vm324, %v371, 0
        %385 = vmatpush.bf16.msra.mxu0 0
        %386 = vmatpush.bf16.msra.mxu0 0
        %387 = vmatpush.bf16.msra.mxu0 0
        %388 = vmatpush.bf16.msra.mxu0 0
        %389 = vmatpush.bf16.msra.mxu0 0
        %390 = vmatpush.bf16.msra.mxu0 0
        %391 = vmatpush.bf16.msra.mxu0 %v383
        %392 = vmatpush.bf16.msra.mxu0 %v370
        %393 = vmatmul.bf16.gmra.mxu0 %v380
        %v394 = vpop.f32.mrf.mxu0
        %v395 = vadd.f32 %v376, %v394
        %v396 = vpop.f32.mrf.mxu0
        %397 = vdwg.mxu0
        %v398 = vmax.f32 %v395, 0.0
        %v399 = vld [vmem:[%s5] sm:$0xf]
        %v400 = vpack.c.bf16 %v308, %v308
        %v401 = vld [vmem:[%s6] sm:$0xff]
        %403 = vset.pattern.permute.xlu0 0
        %404 = vperm.xlu0 %403, %v401
        %v405 = vpop.permute.xlu0 %404
        %v408 = vsel %vm314, %v399, 0
        %vm410 = vcmask 1041408
        %v412 = vsel %vm410, %v400, 0
        %414 = vmatpush.bf16.msra.mxu0 0
        %415 = vmatpush.bf16.msra.mxu0 0
        %416 = vmatpush.bf16.msra.mxu0 0
        %417 = vmatpush.bf16.msra.mxu0 0
        %418 = vmatpush.bf16.msra.mxu0 0
        %419 = vmatpush.bf16.msra.mxu0 0
        %420 = vmatpush.bf16.msra.mxu0 0
        %421 = vmatpush.bf16.msra.mxu0 %v412
        %422 = vmatmul.bf16.gmra.mxu0 %v408
        %v423 = vpop.f32.mrf.mxu0
        %v424 = vadd.f32 %v405, %v423
        %v425 = vpop.f32.mrf.mxu0
        %426 = vdwg.mxu0
        %v427 = vadd.f32 %v398, %v424
        %v428 = vmax.f32 %v427, 0.0
        %vm429 = vcmask 130048
        %430 = vst.msk [vmem:[%s291] sm:$0xff] %vm429, %v428
        %431 = vrot.lane.b32.xlu0 %v315, 112
        %v432 = vpop.permute.xlu0 %431
        %vm434 = vcmask 27648
        %435 = vst.msk [vmem:[#allocation2] sm:$0xf] %vm434, %v432
        %436 = vrot.lane.b32.xlu0 %v361, 112
        %v437 = vpop.permute.xlu0 %436
        %439 = vst.msk [vmem:[#allocation3] sm:$0xff] %vm314, %v437
        %s440 = sand.u32 %s197, 1
        %s441 = scalar_lea.sflag [#allocation5], %s440
        %s442 = sand.u32 %s197, 1
        %s443 = smul.addr %s442, 8
        %s444 = scalar_lea.vmem [#allocation4], %s443
        // Predicated region
        $region53: #{tpu_custom_call.1} parent=47 // pred_check
          %p445 = pneg %p207
        $region54: #{tpu_custom_call.1} parent=47 // pred_check_branch
          %447 = sbr.rel (%p445) target = $region56
        $region55: #{tpu_custom_call.1} parent=47 // pred_region
          %449 = vsyncadd %s441, 0
          %s450 = sadd.s32 %s26, %s25
          %s451 = smul.addr %s450, 8
          %s452 = scalar_lea.hbm %s7, %s451
          %s454 = sshll.u32 %s444, 4
          %s455 = int_to_ptr.vmem [resolvable:$true] %s454
          %s456 = sshll.u32 %s452, 4
          %s457 = int_to_ptr.hbm [resolvable:$true] %s456
          %459 = dma.vmem_to_hbm [thread:$0]  %s455, 128, %s457, %s441
        $region56: #{tpu_custom_call.1} parent=47 // pred_fallthru
          _
      $region48: #{tpu_custom_call.1} parent=5 // pred_fallthru
        _
      %p460 = scmp.le.s32.totalorder 2, %s16
      // Predicated region
      $region57: #{tpu_custom_call.1} parent=5 // pred_check
        %p461 = pneg %p460
      $region58: #{tpu_custom_call.1} parent=5 // pred_check_branch
        %463 = sbr.rel (%p461) target = $region60
      $region59: #{tpu_custom_call.1} parent=5 // pred_region
        %s464 = ssub.s32 %s16, 2
        // Predicated region
        $region61: #{tpu_custom_call.1} parent=59 // pred_check
          %p465 = pneg %p213
        $region62: #{tpu_custom_call.1} parent=59 // pred_check_branch
          %467 = sbr.rel (%p465) target = $region64
        $region63: #{tpu_custom_call.1} parent=59 // pred_region
          %s468 = sand.u32 %s198, 1
          %s469 = scalar_lea.sflag [#allocation5], %s468
          %s470 = sand.u32 %s198, 1
          %s471 = smul.addr %s470, 8
          %s472 = scalar_lea.vmem [#allocation4], %s471
          %474 = dma.done %s469, 128
        $region64: #{tpu_custom_call.1} parent=59 // pred_fallthru
          _
      $region60: #{tpu_custom_call.1} parent=5 // pred_fallthru
        _
    $region6: #{tpu_custom_call.1} parent=1 // loop_footer
      %s20 = sadd.s32 1, %s16
    $region7: #{tpu_custom_call.1} parent=1 // loop_footer_branch
      %15 = sbr.rel target = $region3
    $region8: #{tpu_custom_call.1} parent=1 // loop_exit
      _
    %475 = vsyncpa [#allocation5], 1
    %s476 = scalar_lea.sflag [#allocation5], 1
    %477 = vsyncpa %s476, 1

</llo_original>
